<compile_context>
chip_gen: v5e
topology: v5e:2x2
jax: 0.10.0
libtpu: 0.0.40
codegen_flags: <defaults>
</compile_context>

<pallas_src>
import functools
from typing import NamedTuple

import jax
import jax.numpy as jnp
from jax.experimental import pallas as pl
from jax.experimental.pallas import tpu as pltpu

LN_EPS = 1e-5  # PyTorch nn.LayerNorm default


def _round_up(x: int, m: int) -> int:
    return (x + m - 1) // m * m


class LayerParams(NamedTuple):
    w: jax.Array       # (in_pad, out_pad) matmul-dtype, zero padded
    pgb: jax.Array     # (8, out_pad) f32: row0=bias, row1=gamma, row2=beta, rest zero
    in_dim: int
    out_dim: int


def prepare_params(w, b, gamma, beta, *, matmul_dtype=jnp.bfloat16) -> LayerParams:
    """Pad + pack the Layer parameters ONCE (call at init, reuse every forward).

    w: (in_dim, out_dim); b/gamma/beta: (out_dim,) or (1, out_dim), any float dtype.
    matmul_dtype: MXU operand dtype. bf16 is recommended on v5e/v6e/v7x alike
                  (native MXU rate, halved weight DMA/VMEM); LayerNorm math stays f32.
    """
    in_dim, out_dim = w.shape
    in_pad = _round_up(in_dim, 128)
    out_pad = _round_up(out_dim, 128)
    wp = jnp.pad(jnp.asarray(w, jnp.float32),
                 ((0, in_pad - in_dim), (0, out_pad - out_dim))).astype(matmul_dtype)
    pgb = jnp.zeros((8, out_pad), jnp.float32)
    pgb = pgb.at[0, :out_dim].set(jnp.asarray(b, jnp.float32).reshape(-1))
    pgb = pgb.at[1, :out_dim].set(jnp.asarray(gamma, jnp.float32).reshape(-1))
    pgb = pgb.at[2, :out_dim].set(jnp.asarray(beta, jnp.float32).reshape(-1))
    return LayerParams(wp, pgb, in_dim, out_dim)


def _vmem_budget_bytes() -> int:
    """Generation-aware VMEM budget with headroom for compiler-internal scratch."""
    try:
        cap = int(pltpu.get_tpu_info().vmem_capacity_bytes)
    except Exception:
        cap = 64 * 2**20  # conservative default (v7x has 64 MiB per TensorCore)
    return int(max(32 * 2**20, min(cap - 8 * 2**20, int(cap * 0.85))))


# ----------------------------------------------------------------------------------
# Kernels
# ----------------------------------------------------------------------------------
def _ln_relu(y, p_ref, out_dim):
    """One-pass LayerNorm (biased var) + affine + ReLU on an f32 (tb, out_pad) tile.

    Padded feature columns of y are exactly zero (zero-padded weight columns and
    zero-padded bias), so plain sums already only cover the real features; we just
    divide by the true out_dim.  gamma/beta are zero in padded columns, so the padded
    output columns stay exactly 0.
    """
    inv_n = 1.0 / float(out_dim)
    mean = jnp.sum(y, axis=-1, keepdims=True) * inv_n
    ex2 = jnp.sum(y * y, axis=-1, keepdims=True) * inv_n
    var = jnp.maximum(ex2 - mean * mean, 0.0)   # guard tiny negatives from cancellation
    y_norm = (y - mean) * jax.lax.rsqrt(var + LN_EPS)
    y_aff = y_norm * p_ref[1:2, :] + p_ref[2:3, :]
    return jnp.maximum(y_aff, 0.0)


def _layer_kernel_fullk(x_ref, w_ref, p_ref, o_ref, *, out_dim):
    x = x_ref[...]
    if x.dtype != w_ref.dtype:
        x = x.astype(w_ref.dtype)  # in-kernel cast: cheap VPU convert, no extra HBM pass
    y = jnp.dot(x, w_ref[...], preferred_element_type=jnp.float32)
    y = y + p_ref[0:1, :]                                   # bias
    o_ref[...] = _ln_relu(y, p_ref, out_dim).astype(o_ref.dtype)


def _layer_kernel_ksplit(x_ref, w_ref, p_ref, o_ref, acc_ref, *, out_dim):
    k = pl.program_id(1)

    @pl.when(k == 0)
    def _():
        acc_ref[...] = jnp.zeros_like(acc_ref)

    x = x_ref[...]
    if x.dtype != w_ref.dtype:
        x = x.astype(w_ref.dtype)
    acc_ref[...] += jnp.dot(x, w_ref[...], preferred_element_type=jnp.float32)

    @pl.when(k == pl.num_programs(1) - 1)
    def _():
        y = acc_ref[...] + p_ref[0:1, :]
        o_ref[...] = _ln_relu(y, p_ref, out_dim).astype(o_ref.dtype)


# ----------------------------------------------------------------------------------
# Wrapper
# ----------------------------------------------------------------------------------
def layer_forward(x, params: LayerParams, *, block_b=256, block_k=None,
                  out_dtype=jnp.float32, single_buffer_params=True):
    """Fused Linear -> LayerNorm -> ReLU forward.

    x:       (B, in_dim) float
    params:  LayerParams from prepare_params (padded/packed once at init)
    block_b: max batch tile (rows per grid step)
    block_k: force a K-split tile (multiple of 128 dividing the padded in_dim);
             None = automatic (full-K when the weight fits VMEM, else K-split)
    returns  (B, out_dim) in out_dtype
    """
    B, in_dim = x.shape
    assert in_dim == params.in_dim, "input feature dim mismatch"
    wp, pgb = params.w, params.pgb
    in_pad, out_pad = wp.shape
    out_dim = params.out_dim
    mm_dtype = wp.dtype
    mm_isz = jnp.dtype(mm_dtype).itemsize
    out_isz = jnp.dtype(out_dtype).itemsize

    # ---- batch tile: at least 2 grid steps when possible (use both v7x TCs) --------
    if B > 8:
        tb = min(_round_up(block_b, 8), _round_up((B + 1) // 2, 8))
    else:
        tb = 8
    b_pad = _round_up(B, tb)

    # ---- activations: no wrapper pad/cast HBM pass when already aligned ------------
    if b_pad == B and in_pad == in_dim:
        xp = x                                   # cast to mm_dtype happens in-kernel
    else:
        xp = jnp.pad(x, ((0, b_pad - B), (0, in_pad - in_dim))).astype(mm_dtype)
    x_isz = jnp.dtype(xp.dtype).itemsize

    vmem_budget = _vmem_budget_bytes()

    # ---- resident-weight feasibility (single-buffered constant-index params) -------
    fixed = 8 * out_pad * 4                                  # packed bias/gamma/beta
    tiles = 2 * tb * (in_pad * x_isz + out_pad * out_isz)    # pipelined x / out tiles
    temps = 4 * tb * out_pad * 4                             # f32 intermediates headroom
    full_need = in_pad * out_pad * mm_isz + fixed + tiles + temps
    use_ksplit = (block_k is not None) or (full_need > int(0.9 * vmem_budget))

    if not use_ksplit:
        grid = (b_pad // tb,)
        kernel = functools.partial(_layer_kernel_fullk, out_dim=out_dim)

        def _call(single_buffer):
            if single_buffer:  # constant blocks: the second pipeline buffer is waste
                w_spec = pl.BlockSpec((in_pad, out_pad), lambda i: (0, 0),
                                      pipeline_mode=pl.Buffered(1))
                p_spec = pl.BlockSpec((8, out_pad), lambda i: (0, 0),
                                      pipeline_mode=pl.Buffered(1))
            else:
                w_spec = pl.BlockSpec((in_pad, out_pad), lambda i: (0, 0))
                p_spec = pl.BlockSpec((8, out_pad), lambda i: (0, 0))
            return pl.pallas_call(
                kernel,
                out_shape=jax.ShapeDtypeStruct((b_pad, out_pad), out_dtype),
                grid=grid,
                in_specs=[pl.BlockSpec((tb, in_pad), lambda i: (i, 0)),  # x (pipelined)
                          w_spec, p_spec],
                out_specs=pl.BlockSpec((tb, out_pad), lambda i: (i, 0)),
                compiler_params=pltpu.CompilerParams(
                    dimension_semantics=("parallel",),
                    vmem_limit_bytes=int(vmem_budget)),
            )(xp, wp, pgb)
    else:
        # ---- K-reduction grid: f32 accumulator scratch, epilogue on last k ---------
        if block_k is None:
            avail = vmem_budget - (fixed + 2 * tb * out_pad * out_isz
                                   + tb * out_pad * 4 + temps)
            per128 = 2 * (tb * 128 * x_isz + 128 * out_pad * mm_isz)
            units = max(1, int(avail // max(per128, 1)))
            total_units = in_pad // 128
            d = min(units, total_units)
            while total_units % d:
                d -= 1
            tk = d * 128
        else:
            tk = int(block_k)
        assert tk % 128 == 0 and in_pad % tk == 0, \
            "block_k must be a multiple of 128 dividing the padded in_dim"

        grid = (b_pad // tb, in_pad // tk)
        kernel = functools.partial(_layer_kernel_ksplit, out_dim=out_dim)

        def _call(single_buffer):
            if single_buffer:
                p_spec = pl.BlockSpec((8, out_pad), lambda i, k: (0, 0),
                                      pipeline_mode=pl.Buffered(1))
            else:
                p_spec = pl.BlockSpec((8, out_pad), lambda i, k: (0, 0))
            return pl.pallas_call(
                kernel,
                out_shape=jax.ShapeDtypeStruct((b_pad, out_pad), out_dtype),
                grid=grid,
                in_specs=[pl.BlockSpec((tb, tk), lambda i, k: (i, k)),
                          pl.BlockSpec((tk, out_pad), lambda i, k: (k, 0)),
                          p_spec],
                out_specs=pl.BlockSpec((tb, out_pad), lambda i, k: (i, 0)),
                scratch_shapes=[pltpu.VMEM((tb, out_pad), jnp.float32)],
                compiler_params=pltpu.CompilerParams(
                    dimension_semantics=("parallel", "arbitrary"),
                    vmem_limit_bytes=int(vmem_budget)),
            )(xp, wp, pgb)

    if single_buffer_params:
        try:
            out = _call(True)
        except Exception:
            out = _call(False)   # fallback if Buffered(1) is rejected by this jax build
    else:
        out = _call(False)

    # Skip the extra HBM copy when no un-padding is needed.
    if b_pad == B and out_pad == out_dim:
        return out
    return out[:B, :out_dim]


# ----------------------------------------------------------------------------------
# Reference + self-test
# ----------------------------------------------------------------------------------
def _reference(x, w, b, gamma, beta):
    y = x @ w + b.reshape(1, -1)
    mean = jnp.mean(y, axis=-1, keepdims=True)
    var = jnp.mean((y - mean) ** 2, axis=-1, keepdims=True)
    y = (y - mean) / jnp.sqrt(var + LN_EPS)
    return jnp.maximum(y * gamma.reshape(1, -1) + beta.reshape(1, -1), 0.0)


if __name__ == "__main__":
    # ---------- 1) tiny config (module's toy shapes), strict f32 path ----------
    key = jax.random.PRNGKey(0)
    B, in_dim, out_dim = 2, 32, 32
    kx, kw, kb = jax.random.split(key, 3)
    x = jax.random.normal(kx, (B, in_dim), jnp.float32)
    bound = 1.0 / jnp.sqrt(jnp.float32(in_dim))        # PyTorch Linear-style init
    w = jax.random.uniform(kw, (in_dim, out_dim), jnp.float32, -bound, bound)
    b = jax.random.uniform(kb, (1, out_dim), jnp.float32, -bound, bound)
    gamma = jnp.ones((1, out_dim), jnp.float32)        # nn.LayerNorm init
    beta = jnp.zeros((1, out_dim), jnp.float32)

    p_f32 = prepare_params(w, b, gamma, beta, matmul_dtype=jnp.float32)
    out = layer_forward(x, p_f32)
    jax.block_until_ready(out)
    ref = _reference(x, w, b, gamma, beta)
    assert out.shape == (B, out_dim)
    assert jnp.allclose(out, ref, atol=1e-5, rtol=1e-5), "f32 mismatch vs reference"

    # ---------- 2) larger, misaligned shape, bf16-matmul production path ----------
    B2, in2, out2 = 512, 300, 200                      # exercises batch grid + padding
    k1, k2, k3, k4, k5 = jax.random.split(jax.random.PRNGKey(1), 5)
    x2 = jax.random.normal(k1, (B2, in2), jnp.float32)
    bound2 = 1.0 / jnp.sqrt(jnp.float32(in2))
    w2 = jax.random.uniform(k2, (in2, out2), jnp.float32, -bound2, bound2)
    b2 = jax.random.uniform(k3, (1, out2), jnp.float32, -bound2, bound2)
    g2 = 1.0 + 0.1 * jax.random.normal(k4, (1, out2), jnp.float32)
    bt2 = 0.1 * jax.random.normal(k5, (1, out2), jnp.float32)

    p_bf16 = prepare_params(w2, b2, g2, bt2)           # bf16 matmul operands (default)
    out2_ = layer_forward(x2, p_bf16, block_b=256)
    jax.block_until_ready(out2_)
    ref2 = _reference(x2.astype(jnp.bfloat16).astype(jnp.float32),
                      w2.astype(jnp.bfloat16).astype(jnp.float32), b2, g2, bt2)
    assert out2_.shape == (B2, out2)
    assert jnp.allclose(out2_, ref2, atol=2e-3, rtol=2e-3), "bf16 mismatch vs reference"

    # ---------- 3) force the K-split (accumulator-scratch) path ----------
    B3, in3, out3 = 256, 512, 256                      # fully aligned: no pad, no slice
    k6, k7, k8 = jax.random.split(jax.random.PRNGKey(2), 3)
    x3 = jax.random.normal(k6, (B3, in3), jnp.float32)
    bound3 = 1.0 / jnp.sqrt(jnp.float32(in3))
    w3 = jax.random.uniform(k7, (in3, out3), jnp.float32, -bound3, bound3)
    b3 = jax.random.uniform(k8, (1, out3), jnp.float32, -bound3, bound3)
    g3 = jnp.ones((1, out3), jnp.float32)
    bt3 = jnp.zeros((1, out3), jnp.float32)

    p3 = prepare_params(w3, b3, g3, bt3, matmul_dtype=jnp.float32)
    out3_ = layer_forward(x3, p3, block_b=128, block_k=128)
    jax.block_until_ready(out3_)
    ref3 = _reference(x3, w3, b3, g3, bt3)
    assert out3_.shape == (B3, out3)
    assert jnp.allclose(out3_, ref3, atol=1e-4, rtol=1e-4), "K-split mismatch vs reference"

    print("KERNEL_OK")
</pallas_src>

<mosaic_0001>
module attributes {stable_mosaic.version = 11 : i64} {
  func.func @_layer_kernel_fullk(%arg0: i32, %arg1: memref<8x128xf32, #tpu.memory_space<vmem>>, %arg2: memref<128x128xf32, #tpu.memory_space<vmem>>, %arg3: memref<8x128xf32, #tpu.memory_space<vmem>>, %arg4: memref<8x128xf32, #tpu.memory_space<vmem>>) attributes {dimension_semantics = [#tpu.dimension_semantics<parallel>], iteration_bounds = array<i64: 1>, scalar_prefetch = 0 : i64, scratch_operands = 0 : i64, tpu.core_type = #tpu.core_type<tc>, window_params = [{transform_indices = @transform_0, window_bounds = array<i64: 8, 128>}, {pipeline_mode = #tpu.pipeline_mode<synchronous>, transform_indices = @transform_1, window_bounds = array<i64: 128, 128>}, {pipeline_mode = #tpu.pipeline_mode<synchronous>, transform_indices = @transform_2, window_bounds = array<i64: 8, 128>}, {transform_indices = @transform_3, window_bounds = array<i64: 8, 128>}]} {
    %c0 = arith.constant 0 : index
    %c0_0 = arith.constant 0 : index
    %0 = vector.load %arg1[%c0, %c0_0] : memref<8x128xf32, #tpu.memory_space<vmem>>, vector<8x128xf32>
    %c0_1 = arith.constant 0 : index
    %c0_2 = arith.constant 0 : index
    %1 = vector.load %arg2[%c0_1, %c0_2] : memref<128x128xf32, #tpu.memory_space<vmem>>, vector<128x128xf32>
    %cst = arith.constant dense<0.000000e+00> : vector<8x128xf32>
    %2 = tpu.matmul %0, %1, %cst {dimension_numbers = #tpu.dot_dimension_numbers<[1], [0], [0], [1], [0, 0, 1, 1], [], []>} : vector<8x128xf32>, vector<128x128xf32>, vector<8x128xf32> -> vector<8x128xf32>
    %c0_3 = arith.constant 0 : index
    %c0_4 = arith.constant 0 : index
    %3 = vector.load %arg3[%c0_3, %c0_4] : memref<8x128xf32, #tpu.memory_space<vmem>>, vector<1x128xf32>
    %4 = vector.broadcast %3 : vector<1x128xf32> to vector<8x128xf32>
    %5 = arith.addf %2, %4 : vector<8x128xf32>
    %cst_5 = arith.constant dense<0.000000e+00> : vector<8xf32>
    %6 = vector.multi_reduction <add>, %5, %cst_5 [1] : vector<8x128xf32> to vector<8xf32>
    %7 = vector.shape_cast %6 : vector<8xf32> to vector<8x1xf32>
    %cst_6 = arith.constant 3.125000e-02 : f32
    %8 = vector.broadcast %cst_6 : f32 to vector<8x1xf32>
    %9 = arith.mulf %7, %8 : vector<8x1xf32>
    %10 = arith.mulf %5, %5 : vector<8x128xf32>
    %cst_7 = arith.constant dense<0.000000e+00> : vector<8xf32>
    %11 = vector.multi_reduction <add>, %10, %cst_7 [1] : vector<8x128xf32> to vector<8xf32>
    %12 = vector.shape_cast %11 : vector<8xf32> to vector<8x1xf32>
    %cst_8 = arith.constant 3.125000e-02 : f32
    %13 = vector.broadcast %cst_8 : f32 to vector<8x1xf32>
    %14 = arith.mulf %12, %13 : vector<8x1xf32>
    %15 = arith.mulf %9, %9 : vector<8x1xf32>
    %16 = arith.subf %14, %15 : vector<8x1xf32>
    %cst_9 = arith.constant 0.000000e+00 : f32
    %17 = vector.broadcast %cst_9 : f32 to vector<8x1xf32>
    %18 = arith.maximumf %16, %17 : vector<8x1xf32>
    %19 = vector.broadcast %9 : vector<8x1xf32> to vector<8x128xf32>
    %20 = arith.subf %5, %19 : vector<8x128xf32>
    %cst_10 = arith.constant 9.99999974E-6 : f32
    %21 = vector.broadcast %cst_10 : f32 to vector<8x1xf32>
    %22 = arith.addf %18, %21 : vector<8x1xf32>
    %23 = math.rsqrt %22 : vector<8x1xf32>
    %24 = vector.broadcast %23 : vector<8x1xf32> to vector<8x128xf32>
    %25 = arith.mulf %20, %24 : vector<8x128xf32>
    %c1 = arith.constant 1 : index
    %c0_11 = arith.constant 0 : index
    %26 = vector.load %arg3[%c1, %c0_11] : memref<8x128xf32, #tpu.memory_space<vmem>>, vector<1x128xf32>
    %27 = vector.broadcast %26 : vector<1x128xf32> to vector<8x128xf32>
    %28 = arith.mulf %25, %27 : vector<8x128xf32>
    %c2 = arith.constant 2 : index
    %c0_12 = arith.constant 0 : index
    %29 = vector.load %arg3[%c2, %c0_12] : memref<8x128xf32, #tpu.memory_space<vmem>>, vector<1x128xf32>
    %30 = vector.broadcast %29 : vector<1x128xf32> to vector<8x128xf32>
    %31 = arith.addf %28, %30 : vector<8x128xf32>
    %cst_13 = arith.constant 0.000000e+00 : f32
    %32 = vector.broadcast %cst_13 : f32 to vector<8x128xf32>
    %33 = arith.maximumf %31, %32 : vector<8x128xf32>
    %c0_14 = arith.constant 0 : index
    %c0_15 = arith.constant 0 : index
    %34 = vector.load %arg4[%c0_14, %c0_15] : memref<8x128xf32, #tpu.memory_space<vmem>>, vector<8x128xf32>
    tpu.vector_store %arg4[%c0_14, %c0_15], %33 {strides = array<i32>} : memref<8x128xf32, #tpu.memory_space<vmem>>, vector<8x128xf32>,
    return
  }
  func.func @transform_0(%arg0: i32) -> (i32, i32) {
    %c0_i32 = arith.constant 0 : i32
    %c0_i32_0 = arith.constant 0 : i32
    return %arg0, %c0_i32 : i32, i32
  }
  func.func @transform_1(%arg0: i32) -> (i32, i32) {
    %c0_i32 = arith.constant 0 : i32
    %c0_i32_0 = arith.constant 0 : i32
    %c0_i32_1 = arith.constant 0 : i32
    return %c0_i32, %c0_i32_0 : i32, i32
  }
  func.func @transform_2(%arg0: i32) -> (i32, i32) {
    %c0_i32 = arith.constant 0 : i32
    %c0_i32_0 = arith.constant 0 : i32
    %c0_i32_1 = arith.constant 0 : i32
    return %c0_i32, %c0_i32_0 : i32, i32
  }
  func.func @transform_3(%arg0: i32) -> (i32, i32) {
    %c0_i32 = arith.constant 0 : i32
    %c0_i32_0 = arith.constant 0 : i32
    return %arg0, %c0_i32 : i32, i32
  }
}

module attributes {stable_mosaic.version = 11 : i64} {
  func.func @_layer_kernel_fullk(%arg0: i32, %arg1: memref<8x128xf32, #tpu.memory_space<vmem>>, %arg2: memref<128x128xf32, #tpu.memory_space<vmem>>, %arg3: memref<8x128xf32, #tpu.memory_space<vmem>>, %arg4: memref<8x128xf32, #tpu.memory_space<vmem>>) attributes {dimension_semantics = [#tpu.dimension_semantics<parallel>], iteration_bounds = array<i64: 1>, scalar_prefetch = 0 : i64, scratch_operands = 0 : i64, tpu.core_type = #tpu.core_type<tc>, window_params = [{transform_indices = @transform_0, window_bounds = array<i64: 8, 128>}, {pipeline_mode = #tpu.pipeline_mode<synchronous>, transform_indices = @transform_1, window_bounds = array<i64: 128, 128>}, {pipeline_mode = #tpu.pipeline_mode<synchronous>, transform_indices = @transform_2, window_bounds = array<i64: 8, 128>}, {transform_indices = @transform_3, window_bounds = array<i64: 8, 128>}]} {
    %c0 = arith.constant 0 : index
    %c0_0 = arith.constant 0 : index
    %0 = vector.load %arg1[%c0, %c0_0] : memref<8x128xf32, #tpu.memory_space<vmem>>, vector<8x128xf32>
    %c0_1 = arith.constant 0 : index
    %c0_2 = arith.constant 0 : index
    %1 = vector.load %arg2[%c0_1, %c0_2] : memref<128x128xf32, #tpu.memory_space<vmem>>, vector<128x128xf32>
    %cst = arith.constant dense<0.000000e+00> : vector<8x128xf32>
    %2 = tpu.matmul %0, %1, %cst {dimension_numbers = #tpu.dot_dimension_numbers<[1], [0], [0], [1], [0, 0, 1, 1], [], []>} : vector<8x128xf32>, vector<128x128xf32>, vector<8x128xf32> -> vector<8x128xf32>
    %c0_3 = arith.constant 0 : index
    %c0_4 = arith.constant 0 : index
    %3 = vector.load %arg3[%c0_3, %c0_4] : memref<8x128xf32, #tpu.memory_space<vmem>>, vector<1x128xf32>
    %4 = vector.broadcast %3 : vector<1x128xf32> to vector<8x128xf32>
    %5 = arith.addf %2, %4 : vector<8x128xf32>
    %cst_5 = arith.constant dense<0.000000e+00> : vector<8xf32>
    %6 = vector.multi_reduction <add>, %5, %cst_5 [1] : vector<8x128xf32> to vector<8xf32>
    %7 = vector.shape_cast %6 : vector<8xf32> to vector<8x1xf32>
    %cst_6 = arith.constant 3.125000e-02 : f32
    %8 = vector.broadcast %cst_6 : f32 to vector<8x1xf32>
    %9 = arith.mulf %7, %8 : vector<8x1xf32>
    %10 = arith.mulf %5, %5 : vector<8x128xf32>
    %cst_7 = arith.constant dense<0.000000e+00> : vector<8xf32>
    %11 = vector.multi_reduction <add>, %10, %cst_7 [1] : vector<8x128xf32> to vector<8xf32>
    %12 = vector.shape_cast %11 : vector<8xf32> to vector<8x1xf32>
    %cst_8 = arith.constant 3.125000e-02 : f32
    %13 = vector.broadcast %cst_8 : f32 to vector<8x1xf32>
    %14 = arith.mulf %12, %13 : vector<8x1xf32>
    %15 = arith.mulf %9, %9 : vector<8x1xf32>
    %16 = arith.subf %14, %15 : vector<8x1xf32>
    %cst_9 = arith.constant 0.000000e+00 : f32
    %17 = vector.broadcast %cst_9 : f32 to vector<8x1xf32>
    %18 = arith.maximumf %16, %17 : vector<8x1xf32>
    %19 = vector.broadcast %9 : vector<8x1xf32> to vector<8x128xf32>
    %20 = arith.subf %5, %19 : vector<8x128xf32>
    %cst_10 = arith.constant 9.99999974E-6 : f32
    %21 = vector.broadcast %cst_10 : f32 to vector<8x1xf32>
    %22 = arith.addf %18, %21 : vector<8x1xf32>
    %23 = math.rsqrt %22 : vector<8x1xf32>
    %24 = vector.broadcast %23 : vector<8x1xf32> to vector<8x128xf32>
    %25 = arith.mulf %20, %24 : vector<8x128xf32>
    %c1 = arith.constant 1 : index
    %c0_11 = arith.constant 0 : index
    %26 = vector.load %arg3[%c1, %c0_11] : memref<8x128xf32, #tpu.memory_space<vmem>>, vector<1x128xf32>
    %27 = vector.broadcast %26 : vector<1x128xf32> to vector<8x128xf32>
    %28 = arith.mulf %25, %27 : vector<8x128xf32>
    %c2 = arith.constant 2 : index
    %c0_12 = arith.constant 0 : index
    %29 = vector.load %arg3[%c2, %c0_12] : memref<8x128xf32, #tpu.memory_space<vmem>>, vector<1x128xf32>
    %30 = vector.broadcast %29 : vector<1x128xf32> to vector<8x128xf32>
    %31 = arith.addf %28, %30 : vector<8x128xf32>
    %cst_13 = arith.constant 0.000000e+00 : f32
    %32 = vector.broadcast %cst_13 : f32 to vector<8x128xf32>
    %33 = arith.maximumf %31, %32 : vector<8x128xf32>
    %c0_14 = arith.constant 0 : index
    %c0_15 = arith.constant 0 : index
    %34 = vector.load %arg4[%c0_14, %c0_15] : memref<8x128xf32, #tpu.memory_space<vmem>>, vector<8x128xf32>
    tpu.vector_store %arg4[%c0_14, %c0_15], %33 {strides = array<i32>} : memref<8x128xf32, #tpu.memory_space<vmem>>, vector<8x128xf32>,
    return
  }
  func.func @transform_0(%arg0: i32) -> (i32, i32) {
    %c0_i32 = arith.constant 0 : i32
    %c0_i32_0 = arith.constant 0 : i32
    return %arg0, %c0_i32 : i32, i32
  }
  func.func @transform_1(%arg0: i32) -> (i32, i32) {
    %c0_i32 = arith.constant 0 : i32
    %c0_i32_0 = arith.constant 0 : i32
    %c0_i32_1 = arith.constant 0 : i32
    return %c0_i32, %c0_i32_0 : i32, i32
  }
  func.func @transform_2(%arg0: i32) -> (i32, i32) {
    %c0_i32 = arith.constant 0 : i32
    %c0_i32_0 = arith.constant 0 : i32
    %c0_i32_1 = arith.constant 0 : i32
    return %c0_i32, %c0_i32_0 : i32, i32
  }
  func.func @transform_3(%arg0: i32) -> (i32, i32) {
    %c0_i32 = arith.constant 0 : i32
    %c0_i32_0 = arith.constant 0 : i32
    return %arg0, %c0_i32 : i32, i32
  }
}

</mosaic_0001>

<llo_original>
// kernel: tpu_custom_call.1
$region0: #{tpu_custom_call.1}
  #allocation0 [shape = 'u32[]', space=smem, size = 0x4, offset = 0x4, fixed_abs, tag = 'smem constant byte address 0x4 - core index']
  #allocation1 [shape = 'u32[72,128]{1,0:T(1,128)}', space=vmem, size = 0x9000, scoped, tag = 'internal scratch']
  %s0 = inlined_call_operand.hbm [shape: f32[8,128], index: 0, kind: input, shape index: {}]
  %s1 = inlined_call_operand.hbm [shape: f32[128,128], index: 1, kind: input, shape index: {}]
  %s2 = inlined_call_operand.hbm [shape: f32[8,128], index: 2, kind: input, shape index: {}]
  %s3 = inlined_call_operand.hbm [shape: f32[8,128], index: 3, kind: output, shape index: {}]
  %s4 = sld [smem:[#allocation0]]
  $region34: #{tpu_custom_call.1} parent=0
    _
  %s6 = ssub.s32 1, %s4
  %s7 = scalar_select 0, %s6, %s4
  $region1: #{tpu_custom_call.1} parent=0
    #allocation2 [shape = 'u8[4096]{0}', space=vmem, size = 0x1000, scoped, tag = 'input window, operand 0, single buffered']
    #allocation3 [shape = 's32[1]{0}', space=sflag, size = 0x4, scoped, tag = 'scoped memory for tpu_custom_call.1']
    #allocation4 [shape = 's32[1]{0}', space=sflag, size = 0x4, scoped, tag = 'scoped memory for tpu_custom_call.1']
    #allocation5 [shape = 'u8[65536]{0}', space=vmem, size = 0x10000, scoped, tag = 'input window, operand 1, single buffered']
    #allocation6 [shape = 's32[1]{0}', space=sflag, size = 0x4, scoped, tag = 'scoped memory for tpu_custom_call.1']
    #allocation7 [shape = 'u8[4096]{0}', space=vmem, size = 0x1000, scoped, tag = 'input window, operand 2, single buffered']
    #allocation8 [shape = 'u8[4096]{0}', space=vmem, size = 0x1000, scoped, tag = 'output window, operand 0, single buffered']
    %8 = vsyncpa [#allocation3], 0
    %9 = vsyncpa [#allocation6], 0
    %10 = vsyncpa [#allocation4], 0
    // Predicated region
    $region2: #{tpu_custom_call.1} parent=1 // pred_check
      _
    $region3: #{tpu_custom_call.1} parent=1 // pred_check_branch
      %12 = sbr.rel (0) target = $region5
    $region4: #{tpu_custom_call.1} parent=1 // pred_region
      %14 = vsyncadd [#allocation3], 0
      %s16 = sshll.u32 %s0, 4
      %s17 = int_to_ptr.hbm [resolvable:$true] %s16
      %s18 = sshll.u32 [#allocation2], 4
      %s19 = int_to_ptr.vmem [resolvable:$true] %s18
      %21 = dma.hbm_to_vmem [thread:$0]  %s17, 128, %s19, [#allocation3]
    $region5: #{tpu_custom_call.1} parent=1 // pred_fallthru
      _
    // Predicated region
    $region6: #{tpu_custom_call.1} parent=1 // pred_check
      _
    $region7: #{tpu_custom_call.1} parent=1 // pred_check_branch
      %23 = sbr.rel (0) target = $region9
    $region8: #{tpu_custom_call.1} parent=1 // pred_region
      %25 = vsyncadd [#allocation6], 0
      %s26 = sshll.u32 %s1, 4
      %s27 = int_to_ptr.hbm [resolvable:$true] %s26
      %s28 = sshll.u32 [#allocation5], 4
      %s29 = int_to_ptr.vmem [resolvable:$true] %s28
      %34 = dma.hbm_to_vmem [thread:$0]  %s27, 2048, %s29, [#allocation6], 128, 128, 8
    $region9: #{tpu_custom_call.1} parent=1 // pred_fallthru
      _
    // Predicated region
    $region10: #{tpu_custom_call.1} parent=1 // pred_check
      _
    $region11: #{tpu_custom_call.1} parent=1 // pred_check_branch
      %36 = sbr.rel (0) target = $region13
    $region12: #{tpu_custom_call.1} parent=1 // pred_region
      %38 = vsyncadd [#allocation6], 0
      %s40 = sshll.u32 %s2, 4
      %s41 = int_to_ptr.hbm [resolvable:$true] %s40
      %s42 = sshll.u32 [#allocation7], 4
      %s43 = int_to_ptr.vmem [resolvable:$true] %s42
      %45 = dma.hbm_to_vmem [thread:$0]  %s41, 128, %s43, [#allocation6]
    $region13: #{tpu_custom_call.1} parent=1 // pred_fallthru
      _
    // Predicated region
    $region14: #{tpu_custom_call.1} parent=1 // pred_check
      _
    $region15: #{tpu_custom_call.1} parent=1 // pred_check_branch
      %47 = sbr.rel (0) target = $region17
    $region16: #{tpu_custom_call.1} parent=1 // pred_region
      %49 = dma.done [#allocation3], 128
    $region17: #{tpu_custom_call.1} parent=1 // pred_fallthru
      _
    // Predicated region
    $region18: #{tpu_custom_call.1} parent=1 // pred_check
      _
    $region19: #{tpu_custom_call.1} parent=1 // pred_check_branch
      %51 = sbr.rel (0) target = $region21
    $region20: #{tpu_custom_call.1} parent=1 // pred_region
      %53 = dma.done [#allocation6], 2048
    $region21: #{tpu_custom_call.1} parent=1 // pred_fallthru
      _
    // Predicated region
    $region22: #{tpu_custom_call.1} parent=1 // pred_check
      _
    $region23: #{tpu_custom_call.1} parent=1 // pred_check_branch
      %55 = sbr.rel (0) target = $region25
    $region24: #{tpu_custom_call.1} parent=1 // pred_region
      %57 = dma.done [#allocation6], 128
    $region25: #{tpu_custom_call.1} parent=1 // pred_fallthru
      _
    %v58 = vld [vmem:[#allocation2] sm:$0xff]
    %v59 = vld [vmem:[#allocation5] sm:$0xff]
    %v60 = vld [vmem:[#allocation5 + $0x8] sm:$0xff]
    %v61 = vld [vmem:[#allocation5 + $0x10] sm:$0xff]
    %v62 = vld [vmem:[#allocation5 + $0x18] sm:$0xff]
    %v63 = vld [vmem:[#allocation5 + $0x20] sm:$0xff]
    %v64 = vld [vmem:[#allocation5 + $0x28] sm:$0xff]
    %v65 = vld [vmem:[#allocation5 + $0x30] sm:$0xff]
    %v66 = vld [vmem:[#allocation5 + $0x38] sm:$0xff]
    %v67 = vld [vmem:[#allocation5 + $0x40] sm:$0xff]
    %v68 = vld [vmem:[#allocation5 + $0x48] sm:$0xff]
    %v69 = vld [vmem:[#allocation5 + $0x50] sm:$0xff]
    %v70 = vld [vmem:[#allocation5 + $0x58] sm:$0xff]
    %v71 = vld [vmem:[#allocation5 + $0x60] sm:$0xff]
    %v72 = vld [vmem:[#allocation5 + $0x68] sm:$0xff]
    %v73 = vld [vmem:[#allocation5 + $0x70] sm:$0xff]
    %v74 = vld [vmem:[#allocation5 + $0x78] sm:$0xff]
    %v75 = vld [vmem:[#allocation7] sm:$0x1]
    %v76 = vperm.slane %v75, 0
    %77 = vmatpush.msra.mxu0 %v74
    %78 = vmatpush.msra.mxu0 %v73
    %79 = vmatpush.msra.mxu0 %v72
    %80 = vmatpush.msra.mxu0 %v71
    %81 = vmatpush.msra.mxu0 %v70
    %82 = vmatpush.msra.mxu0 %v69
    %83 = vmatpush.msra.mxu0 %v68
    %84 = vmatpush.msra.mxu0 %v67
    %85 = vmatpush.msra.mxu0 %v66
    %86 = vmatpush.msra.mxu0 %v65
    %87 = vmatpush.msra.mxu0 %v64
    %88 = vmatpush.msra.mxu0 %v63
    %89 = vmatpush.msra.mxu0 %v62
    %90 = vmatpush.msra.mxu0 %v61
    %91 = vmatpush.msra.mxu0 %v60
    %92 = vmatpush.msra.mxu0 %v59
    %93 = vmatmul.f32.gmra.mxu0 %v58
    %v94 = vpop.f32.mrf.mxu0
    %v95 = vadd.f32 %v76, %v94
    %96 = vdwg.mxu0
    %97 = vadd.xlane.f32.xlu0 %v95
    %v98 = vpop.xlane.xlu0 %97
    %v99 = vmul.f32 %v98, 0.03125
    %v100 = vmul.f32 %v95, %v95
    %101 = vadd.xlane.f32.xlu0 %v100
    %v102 = vpop.xlane.xlu0 %101
    %v103 = vmul.f32 %v102, 0.03125
    %v104 = vmul.f32 %v99, %v99
    %v105 = vsub.f32 %v103, %v104
    %v106 = vmax.f32 %v105, 0.0
    %v107 = vsub.f32 %v95, %v99
    %v108 = vadd.f32 %v106, 1e-05
    %v109 = vrsqrt.pop %v108
    %v110 = vmul.f32 %v109, %v108
    %v111 = vmul.f32 %v110, %v109
    %v112 = vmul.f32 0.5, %v111
    %v113 = vsub.f32 1.5, %v112
    %v114 = vmul.f32 %v109, %v113
    %vm115 = vweird.f32 %v108
    %vm116 = vweird.f32 %v109
    %vm117 = vmor %vm115, %vm116
    %v118 = vsel %vm117, %v109, %v114
    %v119 = vmul.f32 %v107, %v118
    %v120 = vld [vmem:[#allocation7 + $0x1] sm:$0x1]
    %v121 = vperm.slane %v120, 0
    %v122 = vmul.f32 %v119, %v121
    %v123 = vld [vmem:[#allocation7 + $0x2] sm:$0x1]
    %v124 = vperm.slane %v123, 0
    %v125 = vadd.f32 %v122, %v124
    %v126 = vmax.f32 %v125, 0.0
    %127 = vst [vmem:[#allocation8] sm:$0xff] %v126
    // Predicated region
    $region26: #{tpu_custom_call.1} parent=1 // pred_check
      _
    $region27: #{tpu_custom_call.1} parent=1 // pred_check_branch
      %129 = sbr.rel (0) target = $region29
    $region28: #{tpu_custom_call.1} parent=1 // pred_region
      %131 = vsyncadd [#allocation4], 0
      %s133 = sshll.u32 [#allocation8], 4
      %s134 = int_to_ptr.vmem [resolvable:$true] %s133
      %s135 = sshll.u32 %s3, 4
      %s136 = int_to_ptr.hbm [resolvable:$true] %s135
      %138 = dma.vmem_to_hbm [thread:$0]  %s134, 128, %s136, [#allocation4]
    $region29: #{tpu_custom_call.1} parent=1 // pred_fallthru
      _
    // Predicated region
    $region30: #{tpu_custom_call.1} parent=1 // pred_check
      _
    $region31: #{tpu_custom_call.1} parent=1 // pred_check_branch
      %140 = sbr.rel (0) target = $region33
    $region32: #{tpu_custom_call.1} parent=1 // pred_region
      %142 = dma.done [#allocation4], 128
    $region33: #{tpu_custom_call.1} parent=1 // pred_fallthru
      _
    %143 = vsyncpa [#allocation3], 1
    %144 = vsyncpa [#allocation6], 1
    %145 = vsyncpa [#allocation4], 1

// kernel: tpu_custom_call.1
$region0: #{tpu_custom_call.1}
  #allocation0 [shape = 'u32[]', space=smem, size = 0x4, offset = 0x4, fixed_abs, tag = 'smem constant byte address 0x4 - core index']
  #allocation1 [shape = 'u32[72,128]{1,0:T(1,128)}', space=vmem, size = 0x9000, scoped, tag = 'internal scratch']
  %s0 = inlined_call_operand.hbm [shape: f32[8,128], index: 0, kind: input, shape index: {}]
  %s1 = inlined_call_operand.hbm [shape: f32[128,128], index: 1, kind: input, shape index: {}]
  %s2 = inlined_call_operand.hbm [shape: f32[8,128], index: 2, kind: input, shape index: {}]
  %s3 = inlined_call_operand.hbm [shape: f32[8,128], index: 3, kind: output, shape index: {}]
  %s4 = sld [smem:[#allocation0]]
  $region34: #{tpu_custom_call.1} parent=0
    _
  %s6 = ssub.s32 1, %s4
  %s7 = scalar_select 0, %s6, %s4
  $region1: #{tpu_custom_call.1} parent=0
    #allocation2 [shape = 'u8[4096]{0}', space=vmem, size = 0x1000, scoped, tag = 'input window, operand 0, single buffered']
    #allocation3 [shape = 's32[1]{0}', space=sflag, size = 0x4, scoped, tag = 'scoped memory for tpu_custom_call.1']
    #allocation4 [shape = 's32[1]{0}', space=sflag, size = 0x4, scoped, tag = 'scoped memory for tpu_custom_call.1']
    #allocation5 [shape = 'u8[65536]{0}', space=vmem, size = 0x10000, scoped, tag = 'input window, operand 1, single buffered']
    #allocation6 [shape = 's32[1]{0}', space=sflag, size = 0x4, scoped, tag = 'scoped memory for tpu_custom_call.1']
    #allocation7 [shape = 'u8[4096]{0}', space=vmem, size = 0x1000, scoped, tag = 'input window, operand 2, single buffered']
    #allocation8 [shape = 'u8[4096]{0}', space=vmem, size = 0x1000, scoped, tag = 'output window, operand 0, single buffered']
    %8 = vsyncpa [#allocation3], 0
    %9 = vsyncpa [#allocation6], 0
    %10 = vsyncpa [#allocation4], 0
    // Predicated region
    $region2: #{tpu_custom_call.1} parent=1 // pred_check
      _
    $region3: #{tpu_custom_call.1} parent=1 // pred_check_branch
      %12 = sbr.rel (0) target = $region5
    $region4: #{tpu_custom_call.1} parent=1 // pred_region
      %14 = vsyncadd [#allocation3], 0
      %s16 = sshll.u32 %s0, 4
      %s17 = int_to_ptr.hbm [resolvable:$true] %s16
      %s18 = sshll.u32 [#allocation2], 4
      %s19 = int_to_ptr.vmem [resolvable:$true] %s18
      %21 = dma.hbm_to_vmem [thread:$0]  %s17, 128, %s19, [#allocation3]
    $region5: #{tpu_custom_call.1} parent=1 // pred_fallthru
      _
    // Predicated region
    $region6: #{tpu_custom_call.1} parent=1 // pred_check
      _
    $region7: #{tpu_custom_call.1} parent=1 // pred_check_branch
      %23 = sbr.rel (0) target = $region9
    $region8: #{tpu_custom_call.1} parent=1 // pred_region
      %25 = vsyncadd [#allocation6], 0
      %s26 = sshll.u32 %s1, 4
      %s27 = int_to_ptr.hbm [resolvable:$true] %s26
      %s28 = sshll.u32 [#allocation5], 4
      %s29 = int_to_ptr.vmem [resolvable:$true] %s28
      %34 = dma.hbm_to_vmem [thread:$0]  %s27, 2048, %s29, [#allocation6], 128, 128, 8
    $region9: #{tpu_custom_call.1} parent=1 // pred_fallthru
      _
    // Predicated region
    $region10: #{tpu_custom_call.1} parent=1 // pred_check
      _
    $region11: #{tpu_custom_call.1} parent=1 // pred_check_branch
      %36 = sbr.rel (0) target = $region13
    $region12: #{tpu_custom_call.1} parent=1 // pred_region
      %38 = vsyncadd [#allocation6], 0
      %s40 = sshll.u32 %s2, 4
      %s41 = int_to_ptr.hbm [resolvable:$true] %s40
      %s42 = sshll.u32 [#allocation7], 4
      %s43 = int_to_ptr.vmem [resolvable:$true] %s42
      %45 = dma.hbm_to_vmem [thread:$0]  %s41, 128, %s43, [#allocation6]
    $region13: #{tpu_custom_call.1} parent=1 // pred_fallthru
      _
    // Predicated region
    $region14: #{tpu_custom_call.1} parent=1 // pred_check
      _
    $region15: #{tpu_custom_call.1} parent=1 // pred_check_branch
      %47 = sbr.rel (0) target = $region17
    $region16: #{tpu_custom_call.1} parent=1 // pred_region
      %49 = dma.done [#allocation3], 128
    $region17: #{tpu_custom_call.1} parent=1 // pred_fallthru
      _
    // Predicated region
    $region18: #{tpu_custom_call.1} parent=1 // pred_check
      _
    $region19: #{tpu_custom_call.1} parent=1 // pred_check_branch
      %51 = sbr.rel (0) target = $region21
    $region20: #{tpu_custom_call.1} parent=1 // pred_region
      %53 = dma.done [#allocation6], 2048
    $region21: #{tpu_custom_call.1} parent=1 // pred_fallthru
      _
    // Predicated region
    $region22: #{tpu_custom_call.1} parent=1 // pred_check
      _
    $region23: #{tpu_custom_call.1} parent=1 // pred_check_branch
      %55 = sbr.rel (0) target = $region25
    $region24: #{tpu_custom_call.1} parent=1 // pred_region
      %57 = dma.done [#allocation6], 128
    $region25: #{tpu_custom_call.1} parent=1 // pred_fallthru
      _
    %v58 = vld [vmem:[#allocation2] sm:$0xff]
    %v59 = vld [vmem:[#allocation5] sm:$0xff]
    %v60 = vld [vmem:[#allocation5 + $0x8] sm:$0xff]
    %v61 = vld [vmem:[#allocation5 + $0x10] sm:$0xff]
    %v62 = vld [vmem:[#allocation5 + $0x18] sm:$0xff]
    %v63 = vld [vmem:[#allocation5 + $0x20] sm:$0xff]
    %v64 = vld [vmem:[#allocation5 + $0x28] sm:$0xff]
    %v65 = vld [vmem:[#allocation5 + $0x30] sm:$0xff]
    %v66 = vld [vmem:[#allocation5 + $0x38] sm:$0xff]
    %v67 = vld [vmem:[#allocation5 + $0x40] sm:$0xff]
    %v68 = vld [vmem:[#allocation5 + $0x48] sm:$0xff]
    %v69 = vld [vmem:[#allocation5 + $0x50] sm:$0xff]
    %v70 = vld [vmem:[#allocation5 + $0x58] sm:$0xff]
    %v71 = vld [vmem:[#allocation5 + $0x60] sm:$0xff]
    %v72 = vld [vmem:[#allocation5 + $0x68] sm:$0xff]
    %v73 = vld [vmem:[#allocation5 + $0x70] sm:$0xff]
    %v74 = vld [vmem:[#allocation5 + $0x78] sm:$0xff]
    %v75 = vld [vmem:[#allocation7] sm:$0x1]
    %v76 = vperm.slane %v75, 0
    %77 = vmatpush.msra.mxu0 %v74
    %78 = vmatpush.msra.mxu0 %v73
    %79 = vmatpush.msra.mxu0 %v72
    %80 = vmatpush.msra.mxu0 %v71
    %81 = vmatpush.msra.mxu0 %v70
    %82 = vmatpush.msra.mxu0 %v69
    %83 = vmatpush.msra.mxu0 %v68
    %84 = vmatpush.msra.mxu0 %v67
    %85 = vmatpush.msra.mxu0 %v66
    %86 = vmatpush.msra.mxu0 %v65
    %87 = vmatpush.msra.mxu0 %v64
    %88 = vmatpush.msra.mxu0 %v63
    %89 = vmatpush.msra.mxu0 %v62
    %90 = vmatpush.msra.mxu0 %v61
    %91 = vmatpush.msra.mxu0 %v60
    %92 = vmatpush.msra.mxu0 %v59
    %93 = vmatmul.f32.gmra.mxu0 %v58
    %v94 = vpop.f32.mrf.mxu0
    %v95 = vadd.f32 %v76, %v94
    %96 = vdwg.mxu0
    %97 = vadd.xlane.f32.xlu0 %v95
    %v98 = vpop.xlane.xlu0 %97
    %v99 = vmul.f32 %v98, 0.03125
    %v100 = vmul.f32 %v95, %v95
    %101 = vadd.xlane.f32.xlu0 %v100
    %v102 = vpop.xlane.xlu0 %101
    %v103 = vmul.f32 %v102, 0.03125
    %v104 = vmul.f32 %v99, %v99
    %v105 = vsub.f32 %v103, %v104
    %v106 = vmax.f32 %v105, 0.0
    %v107 = vsub.f32 %v95, %v99
    %v108 = vadd.f32 %v106, 1e-05
    %v109 = vrsqrt.pop %v108
    %v110 = vmul.f32 %v109, %v108
    %v111 = vmul.f32 %v110, %v109
    %v112 = vmul.f32 0.5, %v111
    %v113 = vsub.f32 1.5, %v112
    %v114 = vmul.f32 %v109, %v113
    %vm115 = vweird.f32 %v108
    %vm116 = vweird.f32 %v109
    %vm117 = vmor %vm115, %vm116
    %v118 = vsel %vm117, %v109, %v114
    %v119 = vmul.f32 %v107, %v118
    %v120 = vld [vmem:[#allocation7 + $0x1] sm:$0x1]
    %v121 = vperm.slane %v120, 0
    %v122 = vmul.f32 %v119, %v121
    %v123 = vld [vmem:[#allocation7 + $0x2] sm:$0x1]
    %v124 = vperm.slane %v123, 0
    %v125 = vadd.f32 %v122, %v124
    %v126 = vmax.f32 %v125, 0.0
    %127 = vst [vmem:[#allocation8] sm:$0xff] %v126
    // Predicated region
    $region26: #{tpu_custom_call.1} parent=1 // pred_check
      _
    $region27: #{tpu_custom_call.1} parent=1 // pred_check_branch
      %129 = sbr.rel (0) target = $region29
    $region28: #{tpu_custom_call.1} parent=1 // pred_region
      %131 = vsyncadd [#allocation4], 0
      %s133 = sshll.u32 [#allocation8], 4
      %s134 = int_to_ptr.vmem [resolvable:$true] %s133
      %s135 = sshll.u32 %s3, 4
      %s136 = int_to_ptr.hbm [resolvable:$true] %s135
      %138 = dma.vmem_to_hbm [thread:$0]  %s134, 128, %s136, [#allocation4]
    $region29: #{tpu_custom_call.1} parent=1 // pred_fallthru
      _
    // Predicated region
    $region30: #{tpu_custom_call.1} parent=1 // pred_check
      _
    $region31: #{tpu_custom_call.1} parent=1 // pred_check_branch
      %140 = sbr.rel (0) target = $region33
    $region32: #{tpu_custom_call.1} parent=1 // pred_region
      %142 = dma.done [#allocation4], 128
    $region33: #{tpu_custom_call.1} parent=1 // pred_fallthru
      _
    %143 = vsyncpa [#allocation3], 1
    %144 = vsyncpa [#allocation6], 1
    %145 = vsyncpa [#allocation4], 1

</llo_original>
